<compile_context>
chip_gen: v6e
topology: v6e:2x2x1
jax: 0.10.0
libtpu: 0.0.40
codegen_flags: <defaults>
</compile_context>

<pallas_src>
import functools

import jax
import jax.numpy as jnp
from jax.experimental import pallas as pl
from jax.experimental.pallas import tpu as pltpu


# --------------------------------------------------------------------------- #
# Kernel
# --------------------------------------------------------------------------- #
def dueling_kernel(x_ref, w1_ref, b1_ref,
                   wv1_ref, bv1_ref, wvo_ref, bvo_ref,
                   wa1_ref, ba1_ref, wao_ref, bao_ref,
                   o_ref, *, action_size):
    mm_dtype = x_ref.dtype  # matmul-operand dtype (f32 or bf16)

    # Shared trunk: Linear(state, 64) + ReLU
    h = jnp.dot(x_ref[...], w1_ref[...], preferred_element_type=jnp.float32)
    h = jnp.maximum(h + b1_ref[...], 0.0).astype(mm_dtype)

    # Value stream: Linear(64, 64) + ReLU -> Linear(64, 1)
    v = jnp.dot(h, wv1_ref[...], preferred_element_type=jnp.float32)
    v = jnp.maximum(v + bv1_ref[...], 0.0).astype(mm_dtype)
    v = jnp.dot(v, wvo_ref[...], preferred_element_type=jnp.float32) + bvo_ref[...]

    # Advantage stream: Linear(64, 64) + ReLU -> Linear(64, A_pad)
    a = jnp.dot(h, wa1_ref[...], preferred_element_type=jnp.float32)
    a = jnp.maximum(a + ba1_ref[...], 0.0).astype(mm_dtype)
    a = jnp.dot(a, wao_ref[...], preferred_element_type=jnp.float32) + bao_ref[...]

    # Padded advantage lanes are exactly zero (zero-padded weights/bias), so the
    # full-lane sum equals the sum over the real `action_size` lanes.
    a_mean = jnp.sum(a, axis=-1, keepdims=True) * (1.0 / float(action_size))

    o_ref[...] = (v + a - a_mean).astype(o_ref.dtype)


# --------------------------------------------------------------------------- #
# Wrapper
# --------------------------------------------------------------------------- #
def _round_up(n, m):
    return (n + m - 1) // m * m


def _pad_to(arr, shape):
    pads = [(0, t - s) for s, t in zip(arr.shape, shape)]
    return jnp.pad(arr, pads)


def dueling_qnetwork_forward(x, params, *, compute_dtype=jnp.float32, tile_b=512):
    """x: (batch, state_size) f32.  params: dict (see init_params).

    compute_dtype: dtype fed to the MXU (use jnp.bfloat16 on v6e/v7x).
    """
    batch, state_size = x.shape
    hidden = params["w1"].shape[1]            # 64
    action_size = params["w_ao"].shape[1]     # real (unpadded) action count

    k_pad = _round_up(state_size, 128)        # lane-dense K for the first matmul
    a_pad = _round_up(action_size, 128)       # lane-dense output width
    tb = min(tile_b, _round_up(batch, 8))     # sublane-aligned batch tile
    b_pad = _round_up(batch, tb)
    grid_b = b_pad // tb

    # --- pad / cast operands (zero padding is mathematically exact) ---------
    xp = _pad_to(x, (b_pad, k_pad)).astype(compute_dtype)
    w1 = _pad_to(params["w1"], (k_pad, hidden)).astype(compute_dtype)
    b1 = params["b1"].astype(jnp.float32)
    wv1 = params["w_v1"].astype(compute_dtype)
    bv1 = params["b_v1"].astype(jnp.float32)
    wvo = params["w_vo"].astype(compute_dtype)
    bvo = params["b_vo"].astype(jnp.float32)
    wa1 = params["w_a1"].astype(compute_dtype)
    ba1 = params["b_a1"].astype(jnp.float32)
    wao = _pad_to(params["w_ao"], (hidden, a_pad)).astype(compute_dtype)
    bao = _pad_to(params["b_ao"], (1, a_pad)).astype(jnp.float32)

    weights = (w1, b1, wv1, bv1, wvo, bvo, wa1, ba1, wao, bao)

    def resident(shape):  # weights: same block every grid step -> DMA'd once
        return pl.BlockSpec(shape, lambda i: (0, 0))

    flops = 2 * b_pad * (k_pad * hidden + 2 * hidden * hidden
                         + hidden * 1 + hidden * a_pad)
    bytes_accessed = int(
        xp.size * xp.dtype.itemsize
        + b_pad * a_pad * 4
        + sum(w.size * w.dtype.itemsize for w in weights)
    )

    out = pl.pallas_call(
        functools.partial(dueling_kernel, action_size=action_size),
        out_shape=jax.ShapeDtypeStruct((b_pad, a_pad), jnp.float32),
        grid=(grid_b,),
        in_specs=[
            pl.BlockSpec((tb, k_pad), lambda i: (i, 0)),   # x: streamed by batch tile
            resident(w1.shape), resident(b1.shape),
            resident(wv1.shape), resident(bv1.shape),
            resident(wvo.shape), resident(bvo.shape),
            resident(wa1.shape), resident(ba1.shape),
            resident(wao.shape), resident(bao.shape),
        ],
        out_specs=pl.BlockSpec((tb, a_pad), lambda i: (i, 0)),
        compiler_params=pltpu.CompilerParams(
            dimension_semantics=("parallel",)),
        cost_estimate=pl.CostEstimate(
            flops=flops, transcendentals=0, bytes_accessed=bytes_accessed),
    )(xp, *weights)

    return out[:batch, :action_size]


# --------------------------------------------------------------------------- #
# Parameter init (mimics torch.nn.Linear default U(-1/sqrt(fan_in), ...)) and
# a pure-JAX reference.
# --------------------------------------------------------------------------- #
def init_params(key, state_size, action_size, hidden=64):
    def linear(k, fan_in, fan_out):
        kw, kb = jax.random.split(k)
        bound = 1.0 / jnp.sqrt(jnp.float32(fan_in))
        w = jax.random.uniform(kw, (fan_in, fan_out), jnp.float32, -bound, bound)
        b = jax.random.uniform(kb, (1, fan_out), jnp.float32, -bound, bound)
        return w, b

    k1, k2, k3, k4, k5 = jax.random.split(key, 5)
    w1, b1 = linear(k1, state_size, hidden)
    w_v1, b_v1 = linear(k2, hidden, hidden)
    w_vo, b_vo = linear(k3, hidden, 1)
    w_a1, b_a1 = linear(k4, hidden, hidden)
    w_ao, b_ao = linear(k5, hidden, action_size)
    return dict(w1=w1, b1=b1, w_v1=w_v1, b_v1=b_v1, w_vo=w_vo, b_vo=b_vo,
                w_a1=w_a1, b_a1=b_a1, w_ao=w_ao, b_ao=b_ao)


def dueling_ref(x, p):
    h = jnp.maximum(x @ p["w1"] + p["b1"], 0.0)
    v = jnp.maximum(h @ p["w_v1"] + p["b_v1"], 0.0)
    v = v @ p["w_vo"] + p["b_vo"]
    a = jnp.maximum(h @ p["w_a1"] + p["b_a1"], 0.0)
    a = a @ p["w_ao"] + p["b_ao"]
    return v + a - a.mean(axis=1, keepdims=True)


# --------------------------------------------------------------------------- #
# Self-test
# --------------------------------------------------------------------------- #
if __name__ == "__main__":
    state_size, action_size = 37, 4   # Banana-navigation sizes
    key = jax.random.PRNGKey(0)
    k_params, k_x1, k_x2 = jax.random.split(key, 3)
    params = init_params(k_params, state_size, action_size)

    # 1) Small batch (action-selection path), f32, strict check.
    x_small = jax.random.normal(k_x1, (2, state_size), jnp.float32)
    out_small = jax.block_until_ready(dueling_qnetwork_forward(x_small, params))
    ref_small = dueling_ref(x_small, params)
    assert out_small.shape == (2, action_size)
    assert jnp.allclose(out_small, ref_small, atol=1e-5, rtol=1e-5)

    # 2) Larger batch exercising the batch grid (>1 tile) + padding, f32.
    x_big = jax.random.normal(k_x2, (600, state_size), jnp.float32)
    out_big = jax.block_until_ready(dueling_qnetwork_forward(x_big, params))
    ref_big = dueling_ref(x_big, params)
    assert out_big.shape == (600, action_size)
    assert jnp.allclose(out_big, ref_big, atol=1e-4, rtol=1e-4)

    # 3) bf16 matmul-operand path (v6e/v7x perf mode), loose tolerance.
    out_bf16 = jax.block_until_ready(
        dueling_qnetwork_forward(x_small, params, compute_dtype=jnp.bfloat16))
    assert out_bf16.shape == (2, action_size)
    assert jnp.allclose(out_bf16, ref_small, atol=1e-1, rtol=1e-1)

    print("KERNEL_OK")
</pallas_src>

<mosaic_0001>
module attributes {stable_mosaic.version = 11 : i64} {
  func.func @dueling_kernel(%arg0: i32, %arg1: memref<8x128xf32, #tpu.memory_space<vmem>>, %arg2: memref<128x64xf32, #tpu.memory_space<vmem>>, %arg3: memref<1x64xf32, #tpu.memory_space<vmem>>, %arg4: memref<64x64xf32, #tpu.memory_space<vmem>>, %arg5: memref<1x64xf32, #tpu.memory_space<vmem>>, %arg6: memref<64x1xf32, #tpu.memory_space<vmem>>, %arg7: memref<1x1xf32, #tpu.memory_space<vmem>>, %arg8: memref<64x64xf32, #tpu.memory_space<vmem>>, %arg9: memref<1x64xf32, #tpu.memory_space<vmem>>, %arg10: memref<64x128xf32, #tpu.memory_space<vmem>>, %arg11: memref<1x128xf32, #tpu.memory_space<vmem>>, %arg12: memref<8x128xf32, #tpu.memory_space<vmem>>) attributes {dimension_semantics = [#tpu.dimension_semantics<parallel>], iteration_bounds = array<i64: 1>, scalar_prefetch = 0 : i64, scratch_operands = 0 : i64, tpu.core_type = #tpu.core_type<tc>, window_params = [{transform_indices = @transform_0, window_bounds = array<i64: 8, 128>}, {pipeline_mode = #tpu.pipeline_mode<synchronous>, transform_indices = @transform_1, window_bounds = array<i64: 128, 64>}, {pipeline_mode = #tpu.pipeline_mode<synchronous>, transform_indices = @transform_2, window_bounds = array<i64: 1, 64>}, {pipeline_mode = #tpu.pipeline_mode<synchronous>, transform_indices = @transform_3, window_bounds = array<i64: 64, 64>}, {pipeline_mode = #tpu.pipeline_mode<synchronous>, transform_indices = @transform_4, window_bounds = array<i64: 1, 64>}, {pipeline_mode = #tpu.pipeline_mode<synchronous>, transform_indices = @transform_5, window_bounds = array<i64: 64, 1>}, {pipeline_mode = #tpu.pipeline_mode<synchronous>, transform_indices = @transform_6, window_bounds = array<i64: 1, 1>}, {pipeline_mode = #tpu.pipeline_mode<synchronous>, transform_indices = @transform_7, window_bounds = array<i64: 64, 64>}, {pipeline_mode = #tpu.pipeline_mode<synchronous>, transform_indices = @transform_8, window_bounds = array<i64: 1, 64>}, {pipeline_mode = #tpu.pipeline_mode<synchronous>, transform_indices = @transform_9, window_bounds = array<i64: 64, 128>}, {pipeline_mode = #tpu.pipeline_mode<synchronous>, transform_indices = @transform_10, window_bounds = array<i64: 1, 128>}, {transform_indices = @transform_11, window_bounds = array<i64: 8, 128>}]} {
    %c0 = arith.constant 0 : index
    %c0_0 = arith.constant 0 : index
    %0 = vector.load %arg1[%c0, %c0_0] : memref<8x128xf32, #tpu.memory_space<vmem>>, vector<8x128xf32>
    %c0_1 = arith.constant 0 : index
    %c0_2 = arith.constant 0 : index
    %1 = vector.load %arg2[%c0_1, %c0_2] : memref<128x64xf32, #tpu.memory_space<vmem>>, vector<128x64xf32>
    %cst = arith.constant dense<0.000000e+00> : vector<8x64xf32>
    %2 = tpu.matmul %0, %1, %cst {dimension_numbers = #tpu.dot_dimension_numbers<[1], [0], [0], [1], [0, 0, 1, 1], [], []>} : vector<8x128xf32>, vector<128x64xf32>, vector<8x64xf32> -> vector<8x64xf32>
    %c0_3 = arith.constant 0 : index
    %c0_4 = arith.constant 0 : index
    %3 = vector.load %arg3[%c0_3, %c0_4] : memref<1x64xf32, #tpu.memory_space<vmem>>, vector<1x64xf32>
    %4 = vector.broadcast %3 : vector<1x64xf32> to vector<8x64xf32>
    %5 = arith.addf %2, %4 : vector<8x64xf32>
    %cst_5 = arith.constant 0.000000e+00 : f32
    %6 = vector.broadcast %cst_5 : f32 to vector<8x64xf32>
    %7 = arith.maximumf %5, %6 : vector<8x64xf32>
    %c0_6 = arith.constant 0 : index
    %c0_7 = arith.constant 0 : index
    %8 = vector.load %arg4[%c0_6, %c0_7] : memref<64x64xf32, #tpu.memory_space<vmem>>, vector<64x64xf32>
    %cst_8 = arith.constant dense<0.000000e+00> : vector<8x64xf32>
    %9 = tpu.matmul %7, %8, %cst_8 {dimension_numbers = #tpu.dot_dimension_numbers<[1], [0], [0], [1], [0, 0, 1, 1], [], []>} : vector<8x64xf32>, vector<64x64xf32>, vector<8x64xf32> -> vector<8x64xf32>
    %c0_9 = arith.constant 0 : index
    %c0_10 = arith.constant 0 : index
    %10 = vector.load %arg5[%c0_9, %c0_10] : memref<1x64xf32, #tpu.memory_space<vmem>>, vector<1x64xf32>
    %11 = vector.broadcast %10 : vector<1x64xf32> to vector<8x64xf32>
    %12 = arith.addf %9, %11 : vector<8x64xf32>
    %cst_11 = arith.constant 0.000000e+00 : f32
    %13 = vector.broadcast %cst_11 : f32 to vector<8x64xf32>
    %14 = arith.maximumf %12, %13 : vector<8x64xf32>
    %c0_12 = arith.constant 0 : index
    %c0_13 = arith.constant 0 : index
    %15 = vector.load %arg6[%c0_12, %c0_13] : memref<64x1xf32, #tpu.memory_space<vmem>>, vector<64x1xf32>
    %cst_14 = arith.constant dense<0.000000e+00> : vector<8x1xf32>
    %16 = tpu.matmul %14, %15, %cst_14 {dimension_numbers = #tpu.dot_dimension_numbers<[1], [0], [0], [1], [0, 0, 1, 1], [], []>} : vector<8x64xf32>, vector<64x1xf32>, vector<8x1xf32> -> vector<8x1xf32>
    %c0_15 = arith.constant 0 : index
    %c0_16 = arith.constant 0 : index
    %17 = vector.load %arg7[%c0_15, %c0_16] : memref<1x1xf32, #tpu.memory_space<vmem>>, vector<1x1xf32>
    %18 = vector.broadcast %17 : vector<1x1xf32> to vector<8x1xf32>
    %19 = arith.addf %16, %18 : vector<8x1xf32>
    %c0_17 = arith.constant 0 : index
    %c0_18 = arith.constant 0 : index
    %20 = vector.load %arg8[%c0_17, %c0_18] : memref<64x64xf32, #tpu.memory_space<vmem>>, vector<64x64xf32>
    %cst_19 = arith.constant dense<0.000000e+00> : vector<8x64xf32>
    %21 = tpu.matmul %7, %20, %cst_19 {dimension_numbers = #tpu.dot_dimension_numbers<[1], [0], [0], [1], [0, 0, 1, 1], [], []>} : vector<8x64xf32>, vector<64x64xf32>, vector<8x64xf32> -> vector<8x64xf32>
    %c0_20 = arith.constant 0 : index
    %c0_21 = arith.constant 0 : index
    %22 = vector.load %arg9[%c0_20, %c0_21] : memref<1x64xf32, #tpu.memory_space<vmem>>, vector<1x64xf32>
    %23 = vector.broadcast %22 : vector<1x64xf32> to vector<8x64xf32>
    %24 = arith.addf %21, %23 : vector<8x64xf32>
    %cst_22 = arith.constant 0.000000e+00 : f32
    %25 = vector.broadcast %cst_22 : f32 to vector<8x64xf32>
    %26 = arith.maximumf %24, %25 : vector<8x64xf32>
    %c0_23 = arith.constant 0 : index
    %c0_24 = arith.constant 0 : index
    %27 = vector.load %arg10[%c0_23, %c0_24] : memref<64x128xf32, #tpu.memory_space<vmem>>, vector<64x128xf32>
    %cst_25 = arith.constant dense<0.000000e+00> : vector<8x128xf32>
    %28 = tpu.matmul %26, %27, %cst_25 {dimension_numbers = #tpu.dot_dimension_numbers<[1], [0], [0], [1], [0, 0, 1, 1], [], []>} : vector<8x64xf32>, vector<64x128xf32>, vector<8x128xf32> -> vector<8x128xf32>
    %c0_26 = arith.constant 0 : index
    %c0_27 = arith.constant 0 : index
    %29 = vector.load %arg11[%c0_26, %c0_27] : memref<1x128xf32, #tpu.memory_space<vmem>>, vector<1x128xf32>
    %30 = vector.broadcast %29 : vector<1x128xf32> to vector<8x128xf32>
    %31 = arith.addf %28, %30 : vector<8x128xf32>
    %cst_28 = arith.constant dense<0.000000e+00> : vector<8xf32>
    %32 = vector.multi_reduction <add>, %31, %cst_28 [1] : vector<8x128xf32> to vector<8xf32>
    %33 = vector.shape_cast %32 : vector<8xf32> to vector<8x1xf32>
    %cst_29 = arith.constant 2.500000e-01 : f32
    %34 = vector.broadcast %cst_29 : f32 to vector<8x1xf32>
    %35 = arith.mulf %33, %34 : vector<8x1xf32>
    %36 = vector.broadcast %19 : vector<8x1xf32> to vector<8x128xf32>
    %37 = arith.addf %36, %31 : vector<8x128xf32>
    %38 = vector.broadcast %35 : vector<8x1xf32> to vector<8x128xf32>
    %39 = arith.subf %37, %38 : vector<8x128xf32>
    %c0_30 = arith.constant 0 : index
    %c0_31 = arith.constant 0 : index
    %40 = vector.load %arg12[%c0_30, %c0_31] : memref<8x128xf32, #tpu.memory_space<vmem>>, vector<8x128xf32>
    tpu.vector_store %arg12[%c0_30, %c0_31], %39 {strides = array<i32>} : memref<8x128xf32, #tpu.memory_space<vmem>>, vector<8x128xf32>,
    return
  }
  func.func @transform_0(%arg0: i32) -> (i32, i32) {
    %c0_i32 = arith.constant 0 : i32
    %c0_i32_0 = arith.constant 0 : i32
    return %arg0, %c0_i32 : i32, i32
  }
  func.func @transform_1(%arg0: i32) -> (i32, i32) {
    %c0_i32 = arith.constant 0 : i32
    %c0_i32_0 = arith.constant 0 : i32
    %c0_i32_1 = arith.constant 0 : i32
    return %c0_i32, %c0_i32_0 : i32, i32
  }
  func.func @transform_2(%arg0: i32) -> (i32, i32) {
    %c0_i32 = arith.constant 0 : i32
    %c0_i32_0 = arith.constant 0 : i32
    %c0_i32_1 = arith.constant 0 : i32
    return %c0_i32, %c0_i32_0 : i32, i32
  }
  func.func @transform_3(%arg0: i32) -> (i32, i32) {
    %c0_i32 = arith.constant 0 : i32
    %c0_i32_0 = arith.constant 0 : i32
    %c0_i32_1 = arith.constant 0 : i32
    return %c0_i32, %c0_i32_0 : i32, i32
  }
  func.func @transform_4(%arg0: i32) -> (i32, i32) {
    %c0_i32 = arith.constant 0 : i32
    %c0_i32_0 = arith.constant 0 : i32
    %c0_i32_1 = arith.constant 0 : i32
    return %c0_i32, %c0_i32_0 : i32, i32
  }
  func.func @transform_5(%arg0: i32) -> (i32, i32) {
    %c0_i32 = arith.constant 0 : i32
    %c0_i32_0 = arith.constant 0 : i32
    %c0_i32_1 = arith.constant 0 : i32
    return %c0_i32, %c0_i32_0 : i32, i32
  }
  func.func @transform_6(%arg0: i32) -> (i32, i32) {
    %c0_i32 = arith.constant 0 : i32
    %c0_i32_0 = arith.constant 0 : i32
    %c0_i32_1 = arith.constant 0 : i32
    return %c0_i32, %c0_i32_0 : i32, i32
  }
  func.func @transform_7(%arg0: i32) -> (i32, i32) {
    %c0_i32 = arith.constant 0 : i32
    %c0_i32_0 = arith.constant 0 : i32
    %c0_i32_1 = arith.constant 0 : i32
    return %c0_i32, %c0_i32_0 : i32, i32
  }
  func.func @transform_8(%arg0: i32) -> (i32, i32) {
    %c0_i32 = arith.constant 0 : i32
    %c0_i32_0 = arith.constant 0 : i32
    %c0_i32_1 = arith.constant 0 : i32
    return %c0_i32, %c0_i32_0 : i32, i32
  }
  func.func @transform_9(%arg0: i32) -> (i32, i32) {
    %c0_i32 = arith.constant 0 : i32
    %c0_i32_0 = arith.constant 0 : i32
    %c0_i32_1 = arith.constant 0 : i32
    return %c0_i32, %c0_i32_0 : i32, i32
  }
  func.func @transform_10(%arg0: i32) -> (i32, i32) {
    %c0_i32 = arith.constant 0 : i32
    %c0_i32_0 = arith.constant 0 : i32
    %c0_i32_1 = arith.constant 0 : i32
    return %c0_i32, %c0_i32_0 : i32, i32
  }
  func.func @transform_11(%arg0: i32) -> (i32, i32) {
    %c0_i32 = arith.constant 0 : i32
    %c0_i32_0 = arith.constant 0 : i32
    return %arg0, %c0_i32 : i32, i32
  }
}

</mosaic_0001>

<llo_original>
// kernel: tpu_custom_call.1
$region0: #{tpu_custom_call.1}
  #allocation0 [shape = 'u32[]', space=smem, size = 0x4, offset = 0x4, fixed_abs, tag = 'smem constant byte address 0x4 - core index']
  #allocation1 [shape = 'u32[144,128]{1,0:T(1,128)}', space=vmem, size = 0x12000, scoped, tag = 'internal scratch']
  #allocation2 [shape = 'f32[1,1]{1,0:T(1,128)S(1)}', space=vmem, size = 0x200, scoped, tag = 'scoped memory for tpu_custom_call.1']
  %s0 = inlined_call_operand.hbm [shape: f32[8,128], index: 0, kind: input, shape index: {}]
  %s1 = inlined_call_operand.vmem [shape: f32[128,64], index: 1, kind: input, shape index: {}]
  %s2 = inlined_call_operand.vmem [shape: f32[1,64], index: 2, kind: input, shape index: {}]
  %s3 = inlined_call_operand.vmem [shape: f32[64,64], index: 3, kind: input, shape index: {}]
  %s4 = inlined_call_operand.vmem [shape: f32[1,64], index: 4, kind: input, shape index: {}]
  %s5 = inlined_call_operand.vmem [shape: f32[64,1], index: 5, kind: input, shape index: {}]
  %s6 = inlined_call_operand.<no memory space> [shape: f32[1,1], index: 6, kind: input, shape index: {}]
  %s7 = inlined_call_operand.vmem [shape: f32[64,64], index: 7, kind: input, shape index: {}]
  %s8 = inlined_call_operand.vmem [shape: f32[1,64], index: 8, kind: input, shape index: {}]
  %s9 = inlined_call_operand.vmem [shape: f32[64,128], index: 9, kind: input, shape index: {}]
  %s10 = inlined_call_operand.vmem [shape: f32[1,128], index: 10, kind: input, shape index: {}]
  %s11 = inlined_call_operand.hbm [shape: f32[8,128], index: 11, kind: output, shape index: {}]
  %s12 = sld [smem:[#allocation0]]
  $region58: #{tpu_custom_call.1} parent=0
    _
  %s14 = ssub.s32 1, %s12
  %s15 = scalar_select 0, %s14, %s12
  %v16 = vstv %s6
  %17 = vst [vmem:[#allocation2] sm:$0x1] %v16
  $region1: #{tpu_custom_call.1} parent=0
    #allocation3 [shape = 'u8[4096]{0}', space=vmem, size = 0x1000, scoped, tag = 'input window, operand 0, single buffered']
    #allocation4 [shape = 's32[1]{0}', space=sflag, size = 0x4, scoped, tag = 'scoped memory for tpu_custom_call.1']
    #allocation5 [shape = 's32[1]{0}', space=sflag, size = 0x4, scoped, tag = 'scoped memory for tpu_custom_call.1']
    #allocation6 [shape = 'u8[4096]{0}', space=vmem, size = 0x1000, scoped, tag = 'output window, operand 0, single buffered']
    %18 = vsyncpa [#allocation4], 0
    %19 = vsyncpa [#allocation5], 0
    // Predicated region
    $region2: #{tpu_custom_call.1} parent=1 // pred_check
      _
    $region3: #{tpu_custom_call.1} parent=1 // pred_check_branch
      %21 = sbr.rel (0) target = $region5
    $region4: #{tpu_custom_call.1} parent=1 // pred_region
      %s23 = ssub.s32 128, 128
      %24 = vsyncadd [#allocation4], %s23
      %s26 = sshll.u32 [#allocation3], 4
      %s27 = int_to_ptr.vmem [resolvable:$true] %s26
      %29 = dma.hbm_to_vmem [thread:$0]  %s0, 128, %s27, [#allocation4]
    $region5: #{tpu_custom_call.1} parent=1 // pred_fallthru
      _
    // Predicated region
    $region6: #{tpu_custom_call.1} parent=1 // pred_check
      _
    $region7: #{tpu_custom_call.1} parent=1 // pred_check_branch
      %31 = sbr.rel (0) target = $region9
    $region8: #{tpu_custom_call.1} parent=1 // pred_region
      _
    $region9: #{tpu_custom_call.1} parent=1 // pred_fallthru
      _
    // Predicated region
    $region10: #{tpu_custom_call.1} parent=1 // pred_check
      _
    $region11: #{tpu_custom_call.1} parent=1 // pred_check_branch
      %33 = sbr.rel (0) target = $region13
    $region12: #{tpu_custom_call.1} parent=1 // pred_region
      _
    $region13: #{tpu_custom_call.1} parent=1 // pred_fallthru
      _
    // Predicated region
    $region14: #{tpu_custom_call.1} parent=1 // pred_check
      _
    $region15: #{tpu_custom_call.1} parent=1 // pred_check_branch
      %35 = sbr.rel (0) target = $region17
    $region16: #{tpu_custom_call.1} parent=1 // pred_region
      _
    $region17: #{tpu_custom_call.1} parent=1 // pred_fallthru
      _
    // Predicated region
    $region18: #{tpu_custom_call.1} parent=1 // pred_check
      _
    $region19: #{tpu_custom_call.1} parent=1 // pred_check_branch
      %37 = sbr.rel (0) target = $region21
    $region20: #{tpu_custom_call.1} parent=1 // pred_region
      _
    $region21: #{tpu_custom_call.1} parent=1 // pred_fallthru
      _
    // Predicated region
    $region22: #{tpu_custom_call.1} parent=1 // pred_check
      _
    $region23: #{tpu_custom_call.1} parent=1 // pred_check_branch
      %39 = sbr.rel (0) target = $region25
    $region24: #{tpu_custom_call.1} parent=1 // pred_region
      _
    $region25: #{tpu_custom_call.1} parent=1 // pred_fallthru
      _
    // Predicated region
    $region26: #{tpu_custom_call.1} parent=1 // pred_check
      _
    $region27: #{tpu_custom_call.1} parent=1 // pred_check_branch
      %41 = sbr.rel (0) target = $region29
    $region28: #{tpu_custom_call.1} parent=1 // pred_region
      _
    $region29: #{tpu_custom_call.1} parent=1 // pred_fallthru
      _
    // Predicated region
    $region30: #{tpu_custom_call.1} parent=1 // pred_check
      _
    $region31: #{tpu_custom_call.1} parent=1 // pred_check_branch
      %43 = sbr.rel (0) target = $region33
    $region32: #{tpu_custom_call.1} parent=1 // pred_region
      _
    $region33: #{tpu_custom_call.1} parent=1 // pred_fallthru
      _
    // Predicated region
    $region34: #{tpu_custom_call.1} parent=1 // pred_check
      _
    $region35: #{tpu_custom_call.1} parent=1 // pred_check_branch
      %45 = sbr.rel (0) target = $region37
    $region36: #{tpu_custom_call.1} parent=1 // pred_region
      _
    $region37: #{tpu_custom_call.1} parent=1 // pred_fallthru
      _
    // Predicated region
    $region38: #{tpu_custom_call.1} parent=1 // pred_check
      _
    $region39: #{tpu_custom_call.1} parent=1 // pred_check_branch
      %47 = sbr.rel (0) target = $region41
    $region40: #{tpu_custom_call.1} parent=1 // pred_region
      _
    $region41: #{tpu_custom_call.1} parent=1 // pred_fallthru
      _
    // Predicated region
    $region42: #{tpu_custom_call.1} parent=1 // pred_check
      _
    $region43: #{tpu_custom_call.1} parent=1 // pred_check_branch
      %49 = sbr.rel (0) target = $region45
    $region44: #{tpu_custom_call.1} parent=1 // pred_region
      _
    $region45: #{tpu_custom_call.1} parent=1 // pred_fallthru
      _
    // Predicated region
    $region46: #{tpu_custom_call.1} parent=1 // pred_check
      _
    $region47: #{tpu_custom_call.1} parent=1 // pred_check_branch
      %51 = sbr.rel (0) target = $region49
    $region48: #{tpu_custom_call.1} parent=1 // pred_region
      %52 = dma.done [#allocation4], 128
    $region49: #{tpu_custom_call.1} parent=1 // pred_fallthru
      _
    %v53 = vld [vmem:[#allocation3] sm:$0xff]
    %v54 = vld [vmem:[%s1] sm:$0xff]
    %v55 = vld [vmem:[%s1 + $0x8] sm:$0xff]
    %v56 = vld [vmem:[%s1 + $0x10] sm:$0xff]
    %v57 = vld [vmem:[%s1 + $0x18] sm:$0xff]
    %v58 = vld [vmem:[%s1 + $0x20] sm:$0xff]
    %v59 = vld [vmem:[%s1 + $0x28] sm:$0xff]
    %v60 = vld [vmem:[%s1 + $0x30] sm:$0xff]
    %v61 = vld [vmem:[%s1 + $0x38] sm:$0xff]
    %v62 = vld [vmem:[%s1 + $0x40] sm:$0xff]
    %v63 = vld [vmem:[%s1 + $0x48] sm:$0xff]
    %v64 = vld [vmem:[%s1 + $0x50] sm:$0xff]
    %v65 = vld [vmem:[%s1 + $0x58] sm:$0xff]
    %v66 = vld [vmem:[%s1 + $0x60] sm:$0xff]
    %v67 = vld [vmem:[%s1 + $0x68] sm:$0xff]
    %v68 = vld [vmem:[%s1 + $0x70] sm:$0xff]
    %v69 = vld [vmem:[%s1 + $0x78] sm:$0xff]
    %v70 = vld [vmem:[%s2] sm:$0x1]
    %v72 = vlaneseq
    %v73 = vshrl.u32 %v72, 7
    %v74 = vsub.s32 0, %v73
    %v75 = vrot.slane %v70, %v74
    %77 = vmatprep.subr.mxu0 0.0
    %78 = vmatpush1.msra.mxu0 %v69
    %79 = vmatprep.subr.mxu0 0.0
    %80 = vmatpush1.msra.mxu0 %v68
    %81 = vmatprep.subr.mxu0 0.0
    %82 = vmatpush1.msra.mxu0 %v67
    %83 = vmatprep.subr.mxu0 0.0
    %84 = vmatpush1.msra.mxu0 %v66
    %85 = vmatprep.subr.mxu0 0.0
    %86 = vmatpush1.msra.mxu0 %v65
    %87 = vmatprep.subr.mxu0 0.0
    %88 = vmatpush1.msra.mxu0 %v64
    %89 = vmatprep.subr.mxu0 0.0
    %90 = vmatpush1.msra.mxu0 %v63
    %91 = vmatprep.subr.mxu0 0.0
    %92 = vmatpush1.msra.mxu0 %v62
    %93 = vmatprep.subr.mxu0 0.0
    %94 = vmatpush1.msra.mxu0 %v61
    %95 = vmatprep.subr.mxu0 0.0
    %96 = vmatpush1.msra.mxu0 %v60
    %97 = vmatprep.subr.mxu0 0.0
    %98 = vmatpush1.msra.mxu0 %v59
    %99 = vmatprep.subr.mxu0 0.0
    %100 = vmatpush1.msra.mxu0 %v58
    %101 = vmatprep.subr.mxu0 0.0
    %102 = vmatpush1.msra.mxu0 %v57
    %103 = vmatprep.subr.mxu0 0.0
    %104 = vmatpush1.msra.mxu0 %v56
    %105 = vmatprep.subr.mxu0 0.0
    %106 = vmatpush1.msra.mxu0 %v55
    %107 = vmatprep.subr.mxu0 0.0
    %108 = vmatpush1.msra.mxu0 %v54
    %109 = vmatprep.subr.mxu0 0.0
    %110 = vmatpush2.msra.mxu0 0.0
    %111 = vmatprep.subr.mxu0 0.0
    %112 = vmatpush2.msra.mxu0 0.0
    %113 = vmatprep.subr.mxu0 0.0
    %114 = vmatpush2.msra.mxu0 0.0
    %115 = vmatprep.subr.mxu0 0.0
    %116 = vmatpush2.msra.mxu0 0.0
    %117 = vmatprep.subr.mxu0 0.0
    %118 = vmatpush2.msra.mxu0 0.0
    %119 = vmatprep.subr.mxu0 0.0
    %120 = vmatpush2.msra.mxu0 0.0
    %121 = vmatprep.subr.mxu0 0.0
    %122 = vmatpush2.msra.mxu0 0.0
    %123 = vmatprep.subr.mxu0 0.0
    %124 = vmatpush2.msra.mxu0 0.0
    %125 = vmatprep.subr.mxu0 0.0
    %126 = vmatpush2.msra.mxu0 0.0
    %127 = vmatprep.subr.mxu0 0.0
    %128 = vmatpush2.msra.mxu0 0.0
    %129 = vmatprep.subr.mxu0 0.0
    %130 = vmatpush2.msra.mxu0 0.0
    %131 = vmatprep.subr.mxu0 0.0
    %132 = vmatpush2.msra.mxu0 0.0
    %133 = vmatprep.subr.mxu0 0.0
    %134 = vmatpush2.msra.mxu0 0.0
    %135 = vmatprep.subr.mxu0 0.0
    %136 = vmatpush2.msra.mxu0 0.0
    %137 = vmatprep.subr.mxu0 0.0
    %138 = vmatpush2.msra.mxu0 0.0
    %139 = vmatprep.subr.mxu0 0.0
    %140 = vmatpush2.msra.mxu0 0.0
    %141 = vmatprep.mubr.f32.mxu0 0.0
    %142 = vmatmul.mubr.f32.gmra.mxu0 %v53
    %v143 = vpop.f32.mrf.mxu0
    %v144 = vadd.f32 %v75, %v143
    %v145 = vpop.f32.mrf.mxu0
    %146 = vdwg.mxu0
    %v147 = vmax.f32 %v144, 0.0
    %v148 = vld [vmem:[%s3] sm:$0xff]
    %v149 = vld [vmem:[%s3 + $0x8] sm:$0xff]
    %v150 = vld [vmem:[%s3 + $0x10] sm:$0xff]
    %v151 = vld [vmem:[%s3 + $0x18] sm:$0xff]
    %v152 = vld [vmem:[%s3 + $0x20] sm:$0xff]
    %v153 = vld [vmem:[%s3 + $0x28] sm:$0xff]
    %v154 = vld [vmem:[%s3 + $0x30] sm:$0xff]
    %v155 = vld [vmem:[%s3 + $0x38] sm:$0xff]
    %v156 = vld [vmem:[%s4] sm:$0x1]
    %v158 = vlaneseq
    %v159 = vshrl.u32 %v158, 7
    %v160 = vsub.s32 0, %v159
    %v161 = vrot.slane %v156, %v160
    %vm163 = vcmask 523264
    %v165 = vsel %vm163, %v147, 0
    %167 = vmatprep.subr.mxu0 0.0
    %168 = vmatpush1.msra.mxu0 0.0
    %169 = vmatprep.subr.mxu0 0.0
    %170 = vmatpush1.msra.mxu0 0.0
    %171 = vmatprep.subr.mxu0 0.0
    %172 = vmatpush1.msra.mxu0 0.0
    %173 = vmatprep.subr.mxu0 0.0
    %174 = vmatpush1.msra.mxu0 0.0
    %175 = vmatprep.subr.mxu0 0.0
    %176 = vmatpush1.msra.mxu0 0.0
    %177 = vmatprep.subr.mxu0 0.0
    %178 = vmatpush1.msra.mxu0 0.0
    %179 = vmatprep.subr.mxu0 0.0
    %180 = vmatpush1.msra.mxu0 0.0
    %181 = vmatprep.subr.mxu0 0.0
    %182 = vmatpush1.msra.mxu0 0.0
    %183 = vmatprep.subr.mxu0 0.0
    %184 = vmatpush1.msra.mxu0 %v155
    %185 = vmatprep.subr.mxu0 0.0
    %186 = vmatpush1.msra.mxu0 %v154
    %187 = vmatprep.subr.mxu0 0.0
    %188 = vmatpush1.msra.mxu0 %v153
    %189 = vmatprep.subr.mxu0 0.0
    %190 = vmatpush1.msra.mxu0 %v152
    %191 = vmatprep.subr.mxu0 0.0
    %192 = vmatpush1.msra.mxu0 %v151
    %193 = vmatprep.subr.mxu0 0.0
    %194 = vmatpush1.msra.mxu0 %v150
    %195 = vmatprep.subr.mxu0 0.0
    %196 = vmatpush1.msra.mxu0 %v149
    %197 = vmatprep.subr.mxu0 0.0
    %198 = vmatpush1.msra.mxu0 %v148
    %199 = vmatprep.subr.mxu0 0.0
    %200 = vmatpush2.msra.mxu0 0.0
    %201 = vmatprep.subr.mxu0 0.0
    %202 = vmatpush2.msra.mxu0 0.0
    %203 = vmatprep.subr.mxu0 0.0
    %204 = vmatpush2.msra.mxu0 0.0
    %205 = vmatprep.subr.mxu0 0.0
    %206 = vmatpush2.msra.mxu0 0.0
    %207 = vmatprep.subr.mxu0 0.0
    %208 = vmatpush2.msra.mxu0 0.0
    %209 = vmatprep.subr.mxu0 0.0
    %210 = vmatpush2.msra.mxu0 0.0
    %211 = vmatprep.subr.mxu0 0.0
    %212 = vmatpush2.msra.mxu0 0.0
    %213 = vmatprep.subr.mxu0 0.0
    %214 = vmatpush2.msra.mxu0 0.0
    %215 = vmatprep.subr.mxu0 0.0
    %216 = vmatpush2.msra.mxu0 0.0
    %217 = vmatprep.subr.mxu0 0.0
    %218 = vmatpush2.msra.mxu0 0.0
    %219 = vmatprep.subr.mxu0 0.0
    %220 = vmatpush2.msra.mxu0 0.0
    %221 = vmatprep.subr.mxu0 0.0
    %222 = vmatpush2.msra.mxu0 0.0
    %223 = vmatprep.subr.mxu0 0.0
    %224 = vmatpush2.msra.mxu0 0.0
    %225 = vmatprep.subr.mxu0 0.0
    %226 = vmatpush2.msra.mxu0 0.0
    %227 = vmatprep.subr.mxu0 0.0
    %228 = vmatpush2.msra.mxu0 0.0
    %229 = vmatprep.subr.mxu0 0.0
    %230 = vmatpush2.msra.mxu0 0.0
    %231 = vmatprep.mubr.f32.mxu0 0.0
    %232 = vmatmul.mubr.f32.gmra.mxu0 %v165
    %v233 = vpop.f32.mrf.mxu0
    %v234 = vadd.f32 %v161, %v233
    %v235 = vpop.f32.mrf.mxu0
    %236 = vdwg.mxu0
    %v237 = vmax.f32 %v234, 0.0
    %v238 = vld [vmem:[%s5] sm:$0xff]
    %v239 = vld [vmem:[%s5 + $0x8] sm:$0xff]
    %v240 = vld [vmem:[%s5 + $0x10] sm:$0xff]
    %v241 = vld [vmem:[%s5 + $0x18] sm:$0xff]
    %v242 = vld [vmem:[%s5 + $0x20] sm:$0xff]
    %v243 = vld [vmem:[%s5 + $0x28] sm:$0xff]
    %v244 = vld [vmem:[%s5 + $0x30] sm:$0xff]
    %v245 = vld [vmem:[%s5 + $0x38] sm:$0xff]
    %v246 = vld [vmem:[#allocation2] sm:$0x1]
    %v248 = vlaneseq
    %v249 = vshrl.u32 %v248, 7
    %v250 = vsub.s32 0, %v249
    %v251 = vrot.slane %v246, %v250
    %v254 = vsel %vm163, %v237, 0
    %256 = vmatprep.subr.mxu0 0.0
    %257 = vmatpush1.msra.mxu0 0.0
    %258 = vmatprep.subr.mxu0 0.0
    %259 = vmatpush1.msra.mxu0 0.0
    %260 = vmatprep.subr.mxu0 0.0
    %261 = vmatpush1.msra.mxu0 0.0
    %262 = vmatprep.subr.mxu0 0.0
    %263 = vmatpush1.msra.mxu0 0.0
    %264 = vmatprep.subr.mxu0 0.0
    %265 = vmatpush1.msra.mxu0 0.0
    %266 = vmatprep.subr.mxu0 0.0
    %267 = vmatpush1.msra.mxu0 0.0
    %268 = vmatprep.subr.mxu0 0.0
    %269 = vmatpush1.msra.mxu0 0.0
    %270 = vmatprep.subr.mxu0 0.0
    %271 = vmatpush1.msra.mxu0 0.0
    %272 = vmatprep.subr.mxu0 0.0
    %273 = vmatpush1.msra.mxu0 %v245
    %274 = vmatprep.subr.mxu0 0.0
    %275 = vmatpush1.msra.mxu0 %v244
    %276 = vmatprep.subr.mxu0 0.0
    %277 = vmatpush1.msra.mxu0 %v243
    %278 = vmatprep.subr.mxu0 0.0
    %279 = vmatpush1.msra.mxu0 %v242
    %280 = vmatprep.subr.mxu0 0.0
    %281 = vmatpush1.msra.mxu0 %v241
    %282 = vmatprep.subr.mxu0 0.0
    %283 = vmatpush1.msra.mxu0 %v240
    %284 = vmatprep.subr.mxu0 0.0
    %285 = vmatpush1.msra.mxu0 %v239
    %286 = vmatprep.subr.mxu0 0.0
    %287 = vmatpush1.msra.mxu0 %v238
    %288 = vmatprep.subr.mxu0 0.0
    %289 = vmatpush2.msra.mxu0 0.0
    %290 = vmatprep.subr.mxu0 0.0
    %291 = vmatpush2.msra.mxu0 0.0
    %292 = vmatprep.subr.mxu0 0.0
    %293 = vmatpush2.msra.mxu0 0.0
    %294 = vmatprep.subr.mxu0 0.0
    %295 = vmatpush2.msra.mxu0 0.0
    %296 = vmatprep.subr.mxu0 0.0
    %297 = vmatpush2.msra.mxu0 0.0
    %298 = vmatprep.subr.mxu0 0.0
    %299 = vmatpush2.msra.mxu0 0.0
    %300 = vmatprep.subr.mxu0 0.0
    %301 = vmatpush2.msra.mxu0 0.0
    %302 = vmatprep.subr.mxu0 0.0
    %303 = vmatpush2.msra.mxu0 0.0
    %304 = vmatprep.subr.mxu0 0.0
    %305 = vmatpush2.msra.mxu0 0.0
    %306 = vmatprep.subr.mxu0 0.0
    %307 = vmatpush2.msra.mxu0 0.0
    %308 = vmatprep.subr.mxu0 0.0
    %309 = vmatpush2.msra.mxu0 0.0
    %310 = vmatprep.subr.mxu0 0.0
    %311 = vmatpush2.msra.mxu0 0.0
    %312 = vmatprep.subr.mxu0 0.0
    %313 = vmatpush2.msra.mxu0 0.0
    %314 = vmatprep.subr.mxu0 0.0
    %315 = vmatpush2.msra.mxu0 0.0
    %316 = vmatprep.subr.mxu0 0.0
    %317 = vmatpush2.msra.mxu0 0.0
    %318 = vmatprep.subr.mxu0 0.0
    %319 = vmatpush2.msra.mxu0 0.0
    %320 = vmatprep.mubr.f32.mxu0 0.0
    %321 = vmatmul.mubr.f32.gmra.mxu0 %v254
    %v322 = vpop.f32.mrf.mxu0
    %v323 = vadd.f32 %v251, %v322
    %v324 = vpop.f32.mrf.mxu0
    %325 = vdwg.mxu0
    %v326 = vld [vmem:[%s7] sm:$0xff]
    %v327 = vld [vmem:[%s7 + $0x8] sm:$0xff]
    %v328 = vld [vmem:[%s7 + $0x10] sm:$0xff]
    %v329 = vld [vmem:[%s7 + $0x18] sm:$0xff]
    %v330 = vld [vmem:[%s7 + $0x20] sm:$0xff]
    %v331 = vld [vmem:[%s7 + $0x28] sm:$0xff]
    %v332 = vld [vmem:[%s7 + $0x30] sm:$0xff]
    %v333 = vld [vmem:[%s7 + $0x38] sm:$0xff]
    %v334 = vld [vmem:[%s8] sm:$0x1]
    %v336 = vlaneseq
    %v337 = vshrl.u32 %v336, 7
    %v338 = vsub.s32 0, %v337
    %v339 = vrot.slane %v334, %v338
    %341 = vmatprep.subr.mxu0 0.0
    %342 = vmatpush1.msra.mxu0 0.0
    %343 = vmatprep.subr.mxu0 0.0
    %344 = vmatpush1.msra.mxu0 0.0
    %345 = vmatprep.subr.mxu0 0.0
    %346 = vmatpush1.msra.mxu0 0.0
    %347 = vmatprep.subr.mxu0 0.0
    %348 = vmatpush1.msra.mxu0 0.0
    %349 = vmatprep.subr.mxu0 0.0
    %350 = vmatpush1.msra.mxu0 0.0
    %351 = vmatprep.subr.mxu0 0.0
    %352 = vmatpush1.msra.mxu0 0.0
    %353 = vmatprep.subr.mxu0 0.0
    %354 = vmatpush1.msra.mxu0 0.0
    %355 = vmatprep.subr.mxu0 0.0
    %356 = vmatpush1.msra.mxu0 0.0
    %357 = vmatprep.subr.mxu0 0.0
    %358 = vmatpush1.msra.mxu0 %v333
    %359 = vmatprep.subr.mxu0 0.0
    %360 = vmatpush1.msra.mxu0 %v332
    %361 = vmatprep.subr.mxu0 0.0
    %362 = vmatpush1.msra.mxu0 %v331
    %363 = vmatprep.subr.mxu0 0.0
    %364 = vmatpush1.msra.mxu0 %v330
    %365 = vmatprep.subr.mxu0 0.0
    %366 = vmatpush1.msra.mxu0 %v329
    %367 = vmatprep.subr.mxu0 0.0
    %368 = vmatpush1.msra.mxu0 %v328
    %369 = vmatprep.subr.mxu0 0.0
    %370 = vmatpush1.msra.mxu0 %v327
    %371 = vmatprep.subr.mxu0 0.0
    %372 = vmatpush1.msra.mxu0 %v326
    %373 = vmatprep.subr.mxu0 0.0
    %374 = vmatpush2.msra.mxu0 0.0
    %375 = vmatprep.subr.mxu0 0.0
    %376 = vmatpush2.msra.mxu0 0.0
    %377 = vmatprep.subr.mxu0 0.0
    %378 = vmatpush2.msra.mxu0 0.0
    %379 = vmatprep.subr.mxu0 0.0
    %380 = vmatpush2.msra.mxu0 0.0
    %381 = vmatprep.subr.mxu0 0.0
    %382 = vmatpush2.msra.mxu0 0.0
    %383 = vmatprep.subr.mxu0 0.0
    %384 = vmatpush2.msra.mxu0 0.0
    %385 = vmatprep.subr.mxu0 0.0
    %386 = vmatpush2.msra.mxu0 0.0
    %387 = vmatprep.subr.mxu0 0.0
    %388 = vmatpush2.msra.mxu0 0.0
    %389 = vmatprep.subr.mxu0 0.0
    %390 = vmatpush2.msra.mxu0 0.0
    %391 = vmatprep.subr.mxu0 0.0
    %392 = vmatpush2.msra.mxu0 0.0
    %393 = vmatprep.subr.mxu0 0.0
    %394 = vmatpush2.msra.mxu0 0.0
    %395 = vmatprep.subr.mxu0 0.0
    %396 = vmatpush2.msra.mxu0 0.0
    %397 = vmatprep.subr.mxu0 0.0
    %398 = vmatpush2.msra.mxu0 0.0
    %399 = vmatprep.subr.mxu0 0.0
    %400 = vmatpush2.msra.mxu0 0.0
    %401 = vmatprep.subr.mxu0 0.0
    %402 = vmatpush2.msra.mxu0 0.0
    %403 = vmatprep.subr.mxu0 0.0
    %404 = vmatpush2.msra.mxu0 0.0
    %405 = vmatprep.mubr.f32.mxu0 0.0
    %406 = vmatmul.mubr.f32.gmra.mxu0 %v165
    %v407 = vpop.f32.mrf.mxu0
    %v408 = vadd.f32 %v339, %v407
    %v409 = vpop.f32.mrf.mxu0
    %410 = vdwg.mxu0
    %v411 = vmax.f32 %v408, 0.0
    %v412 = vld [vmem:[%s9] sm:$0xff]
    %v413 = vld [vmem:[%s9 + $0x8] sm:$0xff]
    %v414 = vld [vmem:[%s9 + $0x10] sm:$0xff]
    %v415 = vld [vmem:[%s9 + $0x18] sm:$0xff]
    %v416 = vld [vmem:[%s9 + $0x20] sm:$0xff]
    %v417 = vld [vmem:[%s9 + $0x28] sm:$0xff]
    %v418 = vld [vmem:[%s9 + $0x30] sm:$0xff]
    %v419 = vld [vmem:[%s9 + $0x38] sm:$0xff]
    %v420 = vld [vmem:[%s10] sm:$0x1]
    %v422 = vlaneseq
    %v423 = vshrl.u32 %v422, 7
    %v424 = vsub.s32 0, %v423
    %v425 = vrot.slane %v420, %v424
    %v428 = vsel %vm163, %v411, 0
    %430 = vmatprep.subr.mxu0 0.0
    %431 = vmatpush1.msra.mxu0 0.0
    %432 = vmatprep.subr.mxu0 0.0
    %433 = vmatpush1.msra.mxu0 0.0
    %434 = vmatprep.subr.mxu0 0.0
    %435 = vmatpush1.msra.mxu0 0.0
    %436 = vmatprep.subr.mxu0 0.0
    %437 = vmatpush1.msra.mxu0 0.0
    %438 = vmatprep.subr.mxu0 0.0
    %439 = vmatpush1.msra.mxu0 0.0
    %440 = vmatprep.subr.mxu0 0.0
    %441 = vmatpush1.msra.mxu0 0.0
    %442 = vmatprep.subr.mxu0 0.0
    %443 = vmatpush1.msra.mxu0 0.0
    %444 = vmatprep.subr.mxu0 0.0
    %445 = vmatpush1.msra.mxu0 0.0
    %446 = vmatprep.subr.mxu0 0.0
    %447 = vmatpush1.msra.mxu0 %v419
    %448 = vmatprep.subr.mxu0 0.0
    %449 = vmatpush1.msra.mxu0 %v418
    %450 = vmatprep.subr.mxu0 0.0
    %451 = vmatpush1.msra.mxu0 %v417
    %452 = vmatprep.subr.mxu0 0.0
    %453 = vmatpush1.msra.mxu0 %v416
    %454 = vmatprep.subr.mxu0 0.0
    %455 = vmatpush1.msra.mxu0 %v415
    %456 = vmatprep.subr.mxu0 0.0
    %457 = vmatpush1.msra.mxu0 %v414
    %458 = vmatprep.subr.mxu0 0.0
    %459 = vmatpush1.msra.mxu0 %v413
    %460 = vmatprep.subr.mxu0 0.0
    %461 = vmatpush1.msra.mxu0 %v412
    %462 = vmatprep.subr.mxu0 0.0
    %463 = vmatpush2.msra.mxu0 0.0
    %464 = vmatprep.subr.mxu0 0.0
    %465 = vmatpush2.msra.mxu0 0.0
    %466 = vmatprep.subr.mxu0 0.0
    %467 = vmatpush2.msra.mxu0 0.0
    %468 = vmatprep.subr.mxu0 0.0
    %469 = vmatpush2.msra.mxu0 0.0
    %470 = vmatprep.subr.mxu0 0.0
    %471 = vmatpush2.msra.mxu0 0.0
    %472 = vmatprep.subr.mxu0 0.0
    %473 = vmatpush2.msra.mxu0 0.0
    %474 = vmatprep.subr.mxu0 0.0
    %475 = vmatpush2.msra.mxu0 0.0
    %476 = vmatprep.subr.mxu0 0.0
    %477 = vmatpush2.msra.mxu0 0.0
    %478 = vmatprep.subr.mxu0 0.0
    %479 = vmatpush2.msra.mxu0 0.0
    %480 = vmatprep.subr.mxu0 0.0
    %481 = vmatpush2.msra.mxu0 0.0
    %482 = vmatprep.subr.mxu0 0.0
    %483 = vmatpush2.msra.mxu0 0.0
    %484 = vmatprep.subr.mxu0 0.0
    %485 = vmatpush2.msra.mxu0 0.0
    %486 = vmatprep.subr.mxu0 0.0
    %487 = vmatpush2.msra.mxu0 0.0
    %488 = vmatprep.subr.mxu0 0.0
    %489 = vmatpush2.msra.mxu0 0.0
    %490 = vmatprep.subr.mxu0 0.0
    %491 = vmatpush2.msra.mxu0 0.0
    %492 = vmatprep.subr.mxu0 0.0
    %493 = vmatpush2.msra.mxu0 0.0
    %494 = vmatprep.mubr.f32.mxu0 0.0
    %495 = vmatmul.mubr.f32.gmra.mxu0 %v428
    %v496 = vpop.f32.mrf.mxu0
    %v497 = vadd.f32 %v425, %v496
    %v498 = vpop.f32.mrf.mxu0
    %499 = vdwg.mxu0
    %500 = vadd.xlane.f32.xlu0 %v497
    %v501 = vpop.xlane.xlu0 %500
    %v502 = vmul.f32 %v501, 0.25
    %504 = vset.pattern.permute.xlu0 0
    %505 = vperm.xlu0 %504, %v323
    %v506 = vpop.permute.xlu0 %505
    %v508 = vadd.f32 %v506, %v497
    %v509 = vsub.f32 %v508, %v502
    %510 = vst [vmem:[#allocation6] sm:$0xff] %v509
    // Predicated region
    $region50: #{tpu_custom_call.1} parent=1 // pred_check
      _
    $region51: #{tpu_custom_call.1} parent=1 // pred_check_branch
      %512 = sbr.rel (0) target = $region53
    $region52: #{tpu_custom_call.1} parent=1 // pred_region
      %s514 = ssub.s32 128, 128
      %515 = vsyncadd [#allocation5], %s514
      %s517 = sshll.u32 [#allocation6], 4
      %s518 = int_to_ptr.vmem [resolvable:$true] %s517
      %520 = dma.vmem_to_hbm [thread:$0]  %s518, 128, %s11, [#allocation5]
    $region53: #{tpu_custom_call.1} parent=1 // pred_fallthru
      _
    // Predicated region
    $region54: #{tpu_custom_call.1} parent=1 // pred_check
      _
    $region55: #{tpu_custom_call.1} parent=1 // pred_check_branch
      %522 = sbr.rel (0) target = $region57
    $region56: #{tpu_custom_call.1} parent=1 // pred_region
      %523 = dma.done [#allocation5], 128
    $region57: #{tpu_custom_call.1} parent=1 // pred_fallthru
      _
    %524 = vsyncpa [#allocation4], 1
    %525 = vsyncpa [#allocation5], 1

</llo_original>
